<compile_context>
chip_gen: v6e
topology: v6e:2x2x1
jax: 0.10.0
libtpu: 0.0.40
codegen_flags: <defaults>
</compile_context>

<pallas_src>
import jax
import jax.numpy as jnp
from jax.experimental import pallas as pl
from jax.experimental.pallas import tpu as pltpu

_MIB = 1024 * 1024


def _identity_kernel(x_ref, o_ref):
    # Plain tile copy; anything fancier can only slow a bandwidth-bound copy.
    o_ref[...] = x_ref[...]


def _copy_2d(x2d, *, tile_r, lanes, grid_steps, vmem_limit, total_bytes):
    rows = x2d.shape[0]
    return pl.pallas_call(
        _identity_kernel,
        out_shape=jax.ShapeDtypeStruct((rows, lanes), x2d.dtype),
        grid_spec=pltpu.PrefetchScalarGridSpec(
            num_scalar_prefetch=0,
            grid=(grid_steps,),
            in_specs=[pl.BlockSpec((tile_r, lanes), lambda i: (i, 0))],
            out_specs=pl.BlockSpec((tile_r, lanes), lambda i: (i, 0)),
        ),
        compiler_params=pltpu.CompilerParams(
            dimension_semantics=("parallel",),
            vmem_limit_bytes=vmem_limit,
        ),
        cost_estimate=pl.CostEstimate(
            flops=0, transcendentals=0, bytes_accessed=2 * total_bytes),
        input_output_aliases={0: 0},
    )(x2d)


def identity(x: jax.Array) -> jax.Array:
    """Pallas implementation of nn.Identity: returns x unchanged (same shape/dtype)."""
    orig_shape = x.shape
    dtype = x.dtype
    total = x.size
    if total == 0:
        return x

    itemsize = jnp.dtype(dtype).itemsize
    total_bytes = total * itemsize

    # Widest lane-dense 2D layout that needs no padding.
    lanes = None
    for cand in (1024, 512, 256, 128):
        if total % cand == 0:
            lanes = cand
            break

    if lanes is None:
        # Rare ragged case (total % 128 != 0): pad flat vector to 128 lanes.
        lanes = 128
        rows = pl.cdiv(total, lanes)
        flat = jnp.pad(x.reshape(-1), (0, rows * lanes - total))
        x2d = flat.reshape(rows, lanes)
        padded = True
    else:
        rows = total // lanes
        x2d = x.reshape(rows, lanes)
        padded = False

    if rows * lanes * itemsize <= 2 * _MIB:
        # Small-input fast path: one full-array block, no pipelining machinery.
        tile_r = rows
        grid_steps = 1
        tile_bytes = rows * lanes * itemsize
    else:
        # Target ~4 MiB tiles, sublane-aligned rows.
        tile_r = max(8, (4 * _MIB // (lanes * itemsize)) // 8 * 8)
        if pl.cdiv(rows, tile_r) < 2:
            # Keep >= 2 grid steps so both v7x TensorCores participate.
            tile_r = max(8, ((pl.cdiv(rows, 2) + 7) // 8) * 8)
        grid_steps = pl.cdiv(rows, tile_r)
        tile_bytes = tile_r * lanes * itemsize

    # 2 inputs-bufs + 2 output-bufs of one tile, plus headroom; clamp for v7x.
    vmem_limit = min(48 * _MIB, max(16 * _MIB, 4 * tile_bytes + 8 * _MIB))

    out2d = _copy_2d(
        x2d,
        tile_r=tile_r,
        lanes=lanes,
        grid_steps=grid_steps,
        vmem_limit=vmem_limit,
        total_bytes=total_bytes,
    )

    if padded:
        return out2d.reshape(-1)[:total].reshape(orig_shape)
    return out2d.reshape(orig_shape)


if __name__ == "__main__":
    key = jax.random.PRNGKey(0)
    k0, k1, k2 = jax.random.split(key, 3)

    # Primary small NCHW test (single-block fast path).
    x = jax.random.normal(k0, (2, 4, 16, 16), dtype=jnp.float32)
    y = jax.block_until_ready(identity(x))
    assert y.shape == x.shape and y.dtype == x.dtype
    assert bool(jnp.all(y == x))

    # Moderate test to exercise the tiled (multi-step grid) path (~3 MiB).
    x_big = jax.random.normal(k1, (4, 64, 56, 56), dtype=jnp.float32)
    y_big = jax.block_until_ready(identity(x_big))
    assert y_big.shape == x_big.shape and y_big.dtype == x_big.dtype
    assert bool(jnp.all(y_big == x_big))

    # Ragged-size test (total % 128 != 0) to exercise the padded fallback.
    x_odd = jax.random.normal(k2, (3, 5, 7), dtype=jnp.float32)
    y_odd = jax.block_until_ready(identity(x_odd))
    assert y_odd.shape == x_odd.shape and y_odd.dtype == x_odd.dtype
    assert bool(jnp.all(y_odd == x_odd))

    print("KERNEL_OK")
</pallas_src>

<mosaic_0001>
module attributes {stable_mosaic.version = 11 : i64} {
  func.func @_identity_kernel(%arg0: i32, %arg1: memref<2x1024xf32, #tpu.memory_space<vmem>>, %arg2: memref<2x1024xf32, #tpu.memory_space<vmem>>) attributes {dimension_semantics = [#tpu.dimension_semantics<parallel>], iteration_bounds = array<i64: 1>, scalar_prefetch = 0 : i64, scratch_operands = 0 : i64, tpu.core_type = #tpu.core_type<tc>, window_params = [{transform_indices = @transform_0, window_bounds = array<i64: 2, 1024>}, {transform_indices = @transform_1, window_bounds = array<i64: 2, 1024>}]} {
    %c0 = arith.constant 0 : index
    %c0_0 = arith.constant 0 : index
    %0 = vector.load %arg1[%c0, %c0_0] : memref<2x1024xf32, #tpu.memory_space<vmem>>, vector<2x1024xf32>
    %c0_1 = arith.constant 0 : index
    %c0_2 = arith.constant 0 : index
    %1 = vector.load %arg2[%c0_1, %c0_2] : memref<2x1024xf32, #tpu.memory_space<vmem>>, vector<2x1024xf32>
    tpu.vector_store %arg2[%c0_1, %c0_2], %0 {strides = array<i32>} : memref<2x1024xf32, #tpu.memory_space<vmem>>, vector<2x1024xf32>,
    return
  }
  func.func @transform_0(%arg0: i32) -> (i32, i32) {
    %c0_i32 = arith.constant 0 : i32
    %c0_i32_0 = arith.constant 0 : i32
    return %arg0, %c0_i32 : i32, i32
  }
  func.func @transform_1(%arg0: i32) -> (i32, i32) {
    %c0_i32 = arith.constant 0 : i32
    %c0_i32_0 = arith.constant 0 : i32
    return %arg0, %c0_i32 : i32, i32
  }
}

</mosaic_0001>

<llo_original>
// kernel: tpu_custom_call.1
$region0: #{tpu_custom_call.1}
  #allocation0 [shape = 'u32[]', space=smem, size = 0x4, offset = 0x4, fixed_abs, tag = 'smem constant byte address 0x4 - core index']
  #allocation1 [shape = 'u32[144,128]{1,0:T(1,128)}', space=vmem, size = 0x12000, scoped, tag = 'internal scratch']
  %s0 = inlined_call_operand.hbm [shape: f32[2,1024], index: 0, kind: input, shape index: {}, may-alias: {0,1}]
  %s1 = inlined_call_operand.hbm [shape: f32[2,1024], index: 1, kind: output, shape index: {}, may-alias: {0,1}]
  %s2 = sld [smem:[#allocation0]]
  $region18: #{tpu_custom_call.1} parent=0
    _
  %s4 = ssub.s32 1, %s2
  %s5 = scalar_select 0, %s4, %s2
  $region1: #{tpu_custom_call.1} parent=0
    #allocation2 [shape = 'u8[8192]{0}', space=vmem, size = 0x2000, scoped, tag = 'input window, operand 0, single buffered']
    #allocation3 [shape = 's32[1]{0}', space=sflag, size = 0x4, scoped, tag = 'scoped memory for tpu_custom_call.1']
    #allocation4 [shape = 's32[1]{0}', space=sflag, size = 0x4, scoped, tag = 'scoped memory for tpu_custom_call.1']
    #allocation5 [shape = 'u8[8192]{0}', space=vmem, size = 0x2000, scoped, tag = 'output window, operand 0, single buffered']
    %6 = vsyncpa [#allocation3], 0
    %7 = vsyncpa [#allocation4], 0
    // Predicated region
    $region2: #{tpu_custom_call.1} parent=1 // pred_check
      _
    $region3: #{tpu_custom_call.1} parent=1 // pred_check_branch
      %9 = sbr.rel (0) target = $region5
    $region4: #{tpu_custom_call.1} parent=1 // pred_region
      %s11 = ssub.s32 256, 256
      %12 = vsyncadd [#allocation3], %s11
      %s14 = sshll.u32 [#allocation2], 4
      %s15 = int_to_ptr.vmem [resolvable:$true] %s14
      %17 = dma.hbm_to_vmem [thread:$0]  %s0, 256, %s15, [#allocation3]
    $region5: #{tpu_custom_call.1} parent=1 // pred_fallthru
      _
    // Predicated region
    $region6: #{tpu_custom_call.1} parent=1 // pred_check
      _
    $region7: #{tpu_custom_call.1} parent=1 // pred_check_branch
      %19 = sbr.rel (0) target = $region9
    $region8: #{tpu_custom_call.1} parent=1 // pred_region
      %20 = dma.done [#allocation3], 256
    $region9: #{tpu_custom_call.1} parent=1 // pred_fallthru
      _
    %v21 = vld [vmem:[#allocation2] sm:$0xff]
    %v22 = vld [vmem:[#allocation2 + $0x8] sm:$0xff]
    %23 = vst [vmem:[#allocation5] sm:$0xff] %v21
    %24 = vst [vmem:[#allocation5 + $0x8] sm:$0xff] %v22
    // Predicated region
    $region10: #{tpu_custom_call.1} parent=1 // pred_check
      _
    $region11: #{tpu_custom_call.1} parent=1 // pred_check_branch
      %26 = sbr.rel (0) target = $region13
    $region12: #{tpu_custom_call.1} parent=1 // pred_region
      %s28 = ssub.s32 256, 256
      %29 = vsyncadd [#allocation4], %s28
      %s31 = sshll.u32 [#allocation5], 4
      %s32 = int_to_ptr.vmem [resolvable:$true] %s31
      %34 = dma.vmem_to_hbm [thread:$0]  %s32, 256, %s1, [#allocation4]
    $region13: #{tpu_custom_call.1} parent=1 // pred_fallthru
      _
    // Predicated region
    $region14: #{tpu_custom_call.1} parent=1 // pred_check
      _
    $region15: #{tpu_custom_call.1} parent=1 // pred_check_branch
      %36 = sbr.rel (0) target = $region17
    $region16: #{tpu_custom_call.1} parent=1 // pred_region
      %37 = dma.done [#allocation4], 256
    $region17: #{tpu_custom_call.1} parent=1 // pred_fallthru
      _
    %38 = vsyncpa [#allocation3], 1
    %39 = vsyncpa [#allocation4], 1

</llo_original>
